<compile_context>
chip_gen: v5e
topology: v5e:2x2
jax: 0.10.0
libtpu: 0.0.40
codegen_flags: <defaults>
</compile_context>

<pallas_src>
import jax
import jax.numpy as jnp
from jax import lax
from jax.experimental import pallas as pl
from jax.experimental.pallas import tpu as pltpu

LN_EPS = 1e-5  # PyTorch nn.LayerNorm default


def bert_embedding_kernel(tok_ids_ref,      # SMEM (N_pad,) int32   scalar-prefetched token ids
                          tok_tab_hbm,      # HBM  (V_tok, H) f32   token table (pl.ANY)
                          sp_ids_ref,       # VMEM (T, 2) int32     col0: seg id, col1: pos id + V_seg
                          sp_tab_ref,       # VMEM (V_seg+V_pos, H) f32
                          gamma_ref,        # VMEM (1, H) f32
                          beta_ref,         # VMEM (1, H) f32
                          out_ref,          # VMEM (T, H)
                          tok_buf,          # VMEM scratch (2, T, H) f32 (double buffer)
                          sem):             # DMA semaphores (2,)
    i = pl.program_id(0)
    n = pl.num_programs(0)
    T, H = out_ref.shape
    V_sp = sp_tab_ref.shape[0]

    def issue_gather(tile_idx, slot):
        base = tile_idx * T

        def body(r, carry):
            row = tok_ids_ref[base + r]
            pltpu.make_async_copy(
                tok_tab_hbm.at[pl.ds(row, 1), :],
                tok_buf.at[slot, pl.ds(r, 1), :],
                sem.at[slot]).start()
            return carry

        lax.fori_loop(0, T, body, 0)

    def wait_gather(slot):
        def body(r, carry):
            # Descriptor only used for its (1, H) size / semaphore; one wait per issued copy.
            pltpu.make_async_copy(
                tok_tab_hbm.at[pl.ds(0, 1), :],
                tok_buf.at[slot, pl.ds(0, 1), :],
                sem.at[slot]).wait()
            return carry

        lax.fori_loop(0, T, body, 0)

    # Prime the pipeline on the first grid step.
    @pl.when(i == 0)
    def _():
        issue_gather(0, 0)

    # Prefetch next tile's token rows into the other slot; overlaps with the compute
    # below and with the pipelined output writeback of this tile.
    @pl.when(i + 1 < n)
    def _():
        issue_gather(i + 1, (i + 1) % 2)

    # Segment + position embeddings via one tiny combined one-hot matmul (disjoint id
    # ranges -> the single product is seg_emb + pos_emb).  Built as (T, V_sp) so the
    # MXU LHS is not transposed.
    iota_v = lax.broadcasted_iota(jnp.int32, (T, V_sp), 1)
    seg = sp_ids_ref[:, 0:1]
    pos = sp_ids_ref[:, 1:2]
    onehot = ((iota_v == seg) | (iota_v == pos)).astype(jnp.float32)
    sp_emb = lax.dot_general(onehot, sp_tab_ref[...],
                             dimension_numbers=(((1,), (0,)), ((), ())),
                             preferred_element_type=jnp.float32)

    # Wait for this tile's token rows, then sum the three embeddings.
    slot = i % 2
    wait_gather(slot)
    x = tok_buf[slot] + sp_emb

    # LayerNorm over H in f32 (two-pass: mean, then centered variance); rsqrt -> EUP.
    mean = jnp.mean(x, axis=-1, keepdims=True)
    xc = x - mean
    var = jnp.mean(xc * xc, axis=-1, keepdims=True)
    y = xc * lax.rsqrt(var + LN_EPS)
    y = y * gamma_ref[...] + beta_ref[...]

    # Dropout: identity in eval mode.
    out_ref[...] = y.astype(out_ref.dtype)


def bert_embedding(token_ids, segment_ids, position_ids,
                   tok_tab, seg_tab, pos_tab, gamma, beta,
                   *, block_tokens=512, out_dtype=jnp.float32):
    B, S = token_ids.shape
    V_tok, H = tok_tab.shape
    V_seg = seg_tab.shape[0]
    V_pos = pos_tab.shape[0]
    N = B * S

    def round_up(x, m):
        return ((x + m - 1) // m) * m

    T = min(round_up(N, 8), round_up(block_tokens, 8))
    n_tiles = pl.cdiv(N, T)
    N_pad = n_tiles * T

    tok_ids = token_ids.reshape(N).astype(jnp.int32)
    sp_ids = jnp.stack(
        [segment_ids.reshape(N).astype(jnp.int32),
         position_ids.reshape(N).astype(jnp.int32) + V_seg], axis=1)     # (N, 2)
    if N_pad != N:
        tok_ids = jnp.pad(tok_ids, (0, N_pad - N))       # pad id 0 -> valid row (rows discarded)
        sp_ids = jnp.pad(sp_ids, ((0, N_pad - N), (0, 0)))

    # Only the tiny seg/pos tables are fused; the big token table is never copied.
    sp_tab = jnp.concatenate([seg_tab, pos_tab], axis=0)                 # (V_seg+V_pos, H)
    V_sp = V_seg + V_pos

    grid_spec = pltpu.PrefetchScalarGridSpec(
        num_scalar_prefetch=1,
        grid=(n_tiles,),
        in_specs=[
            pl.BlockSpec(memory_space=pl.ANY),                       # token table stays in HBM
            pl.BlockSpec((T, 2), lambda i, tids: (i, 0)),            # per-tile seg/pos ids
            pl.BlockSpec((V_sp, H), lambda i, tids: (0, 0)),         # small fused seg+pos table
            pl.BlockSpec((1, H), lambda i, tids: (0, 0)),            # gamma
            pl.BlockSpec((1, H), lambda i, tids: (0, 0)),            # beta
        ],
        out_specs=pl.BlockSpec((T, H), lambda i, tids: (i, 0)),
        scratch_shapes=[
            pltpu.VMEM((2, T, H), jnp.float32),                      # double-buffered token rows
            pltpu.SemaphoreType.DMA((2,)),
        ],
    )

    out_flat = pl.pallas_call(
        bert_embedding_kernel,
        out_shape=jax.ShapeDtypeStruct((N_pad, H), out_dtype),
        grid_spec=grid_spec,
        compiler_params=pltpu.CompilerParams(
            dimension_semantics=("arbitrary",)),
    )(tok_ids, tok_tab, sp_ids, sp_tab,
      gamma.reshape(1, H).astype(jnp.float32),
      beta.reshape(1, H).astype(jnp.float32))

    return out_flat[:N].reshape(B, S, H)


def reference(token_ids, segment_ids, position_ids,
              tok_tab, seg_tab, pos_tab, gamma, beta):
    e = tok_tab[token_ids] + seg_tab[segment_ids] + pos_tab[position_ids]
    mu = e.mean(-1, keepdims=True)
    var = ((e - mu) ** 2).mean(-1, keepdims=True)
    return (e - mu) / jnp.sqrt(var + LN_EPS) * gamma + beta


if __name__ == "__main__":
    # Small, synthetic config consistent with the module's __init__.
    VOCAB_SIZE = 512
    SEGMENT_SIZE = 8
    POSITION_SIZE = 64
    HIDDEN_SIZE = 128
    PAD_TOKEN_ID = 0
    B, S = 2, 64

    key = jax.random.PRNGKey(0)
    k_tok, k_seg, k_pos, k_g, k_b, k_ids, k_sids = jax.random.split(key, 7)

    tok_tab = 0.02 * jax.random.normal(k_tok, (VOCAB_SIZE, HIDDEN_SIZE), jnp.float32)
    # nn.Embedding(padding_idx=...) zero-initializes the pad row.
    tok_tab = tok_tab.at[PAD_TOKEN_ID].set(0.0)
    seg_tab = 0.02 * jax.random.normal(k_seg, (SEGMENT_SIZE, HIDDEN_SIZE), jnp.float32)
    pos_tab = 0.02 * jax.random.normal(k_pos, (POSITION_SIZE, HIDDEN_SIZE), jnp.float32)

    gamma = 1.0 + 0.1 * jax.random.normal(k_g, (HIDDEN_SIZE,), jnp.float32)
    beta = 0.1 * jax.random.normal(k_b, (HIDDEN_SIZE,), jnp.float32)

    token_ids = jax.random.randint(k_ids, (B, S), 0, VOCAB_SIZE, dtype=jnp.int32)
    token_ids = token_ids.at[:, -2:].set(PAD_TOKEN_ID)   # exercise the pad row
    segment_ids = jax.random.randint(k_sids, (B, S), 0, SEGMENT_SIZE, dtype=jnp.int32)
    position_ids = jnp.broadcast_to(jnp.arange(S, dtype=jnp.int32), (B, S))

    ref = reference(token_ids, segment_ids, position_ids,
                    tok_tab, seg_tab, pos_tab, gamma, beta)

    # Single-tile path (default block size).
    out1 = jax.block_until_ready(
        bert_embedding(token_ids, segment_ids, position_ids,
                       tok_tab, seg_tab, pos_tab, gamma, beta))
    # Multi-tile path exercising the cross-step double-buffered DMA gather.
    out2 = jax.block_until_ready(
        bert_embedding(token_ids, segment_ids, position_ids,
                       tok_tab, seg_tab, pos_tab, gamma, beta, block_tokens=32))

    assert out1.shape == (B, S, HIDDEN_SIZE)
    assert jnp.allclose(out1, ref, rtol=1e-5, atol=1e-5), "mismatch vs reference (single tile)"
    assert jnp.allclose(out2, ref, rtol=1e-5, atol=1e-5), "mismatch vs reference (multi tile)"

    print("KERNEL_OK")
</pallas_src>

<mosaic_0001>
module attributes {stable_mosaic.version = 11 : i64} {
  func.func @bert_embedding_kernel(%arg0: i32, %arg1: memref<128xi32, #tpu.memory_space<smem>>, %arg2: memref<512x128xf32, #tpu.memory_space<any>>, %arg3: memref<128x2xi32, #tpu.memory_space<vmem>>, %arg4: memref<72x128xf32, #tpu.memory_space<vmem>>, %arg5: memref<1x128xf32, #tpu.memory_space<vmem>>, %arg6: memref<1x128xf32, #tpu.memory_space<vmem>>, %arg7: memref<128x128xf32, #tpu.memory_space<vmem>>, %arg8: memref<2x128x128xf32, #tpu.memory_space<vmem>>, %arg9: memref<2x!tpu.dma_semaphore, #tpu.memory_space<semaphore_mem>>) attributes {dimension_semantics = [#tpu.dimension_semantics<arbitrary>], iteration_bounds = array<i64: 1>, scalar_prefetch = 1 : i64, scratch_operands = 2 : i64, tpu.core_type = #tpu.core_type<tc>, window_params = [{}, {transform_indices = @transform_1, window_bounds = array<i64: 128, 2>}, {pipeline_mode = #tpu.pipeline_mode<synchronous>, transform_indices = @transform_2, window_bounds = array<i64: 72, 128>}, {pipeline_mode = #tpu.pipeline_mode<synchronous>, transform_indices = @transform_3, window_bounds = array<i64: 1, 128>}, {pipeline_mode = #tpu.pipeline_mode<synchronous>, transform_indices = @transform_4, window_bounds = array<i64: 1, 128>}, {transform_indices = @transform_5, window_bounds = array<i64: 128, 128>}]} {
    %c0_i32 = arith.constant 0 : i32
    %0 = arith.cmpi eq, %arg0, %c0_i32 : i32
    %1 = arith.extui %0 : i1 to i32
    %c0_i32_0 = arith.constant 0 : i32
    %2 = arith.cmpi ne, %1, %c0_i32_0 : i32
    scf.if %2 {
      %c0_i32_27 = arith.constant 0 : i32
      %c128_i32_28 = arith.constant 128 : i32
      %57 = arith.addi %c0_i32_27, %c128_i32_28 : i32
      %c1_i32_29 = arith.constant 1 : i32
      scf.for %arg10 = %c0_i32_27 to %57 step %c1_i32_29  : i32 {
        %c0_i32_31 = arith.constant 0 : i32
        %58 = arith.addi %c0_i32_31, %arg10 : i32
        %59 = arith.index_cast %58 : i32 to index
        %60 = memref.load %arg1[%59] : memref<128xi32, #tpu.memory_space<smem>>
        %c0_i32_32 = arith.constant 0 : i32
        %c0_i32_33 = arith.constant 0 : i32
        %c0_i32_34 = arith.constant 0 : i32
        %61 = tpu.memref_slice %arg2[%60, %c0_i32_34] : memref<512x128xf32, #tpu.memory_space<any>> -> memref<1x128xf32, #tpu.memory_space<any>>
        %c0_i32_35 = arith.constant 0 : i32
        %62 = tpu.memref_slice %arg8[%c0_i32_32, %arg10, %c0_i32_35] : memref<2x128x128xf32, #tpu.memory_space<vmem>> -> memref<1x1x128xf32, #tpu.memory_space<vmem>>
        %63 = tpu.memref_squeeze %62 : memref<1x1x128xf32, #tpu.memory_space<vmem>> -> memref<1x128xf32, #tpu.memory_space<vmem>>
        %64 = tpu.memref_slice %arg9[%c0_i32_33] : memref<2x!tpu.dma_semaphore, #tpu.memory_space<semaphore_mem>> -> memref<1x!tpu.dma_semaphore, #tpu.memory_space<semaphore_mem>>
        %65 = tpu.memref_squeeze %64 : memref<1x!tpu.dma_semaphore, #tpu.memory_space<semaphore_mem>> -> memref<!tpu.dma_semaphore, #tpu.memory_space<semaphore_mem>>
        tpu.enqueue_dma source(%61 : memref<1x128xf32, #tpu.memory_space<any>>) target(%63 : memref<1x128xf32, #tpu.memory_space<vmem>>) target_semaphore(%65 : memref<!tpu.dma_semaphore, #tpu.memory_space<semaphore_mem>>)
      }
      %c128_i32_30 = arith.constant 128 : i32
    } else {
    }
    %c1_i32 = arith.constant 1 : i32
    %3 = arith.addi %arg0, %c1_i32 : i32
    %c1_i32_1 = arith.constant 1 : i32
    %4 = arith.cmpi slt, %3, %c1_i32_1 : i32
    %5 = arith.extui %4 : i1 to i32
    %c0_i32_2 = arith.constant 0 : i32
    %6 = arith.cmpi ne, %5, %c0_i32_2 : i32
    scf.if %6 {
      %c1_i32_27 = arith.constant 1 : i32
      %57 = arith.addi %arg0, %c1_i32_27 : i32
      %c1_i32_28 = arith.constant 1 : i32
      %58 = arith.addi %arg0, %c1_i32_28 : i32
      %c2_i32_29 = arith.constant 2 : i32
      %c0_i32_30 = arith.constant 0 : i32
      %59 = arith.cmpi eq, %c2_i32_29, %c0_i32_30 : i32
      %c1_i32_31 = arith.constant 1 : i32
      %60 = arith.select %59, %c1_i32_31, %c2_i32_29 : i32
      %61 = arith.remsi %58, %60 : i32
      %c0_i32_32 = arith.constant 0 : i32
      %62 = arith.cmpi ne, %61, %c0_i32_32 : i32
      %c0_i32_33 = arith.constant 0 : i32
      %63 = arith.cmpi slt, %61, %c0_i32_33 : i32
      %c0_i32_34 = arith.constant 0 : i32
      %64 = arith.cmpi slt, %60, %c0_i32_34 : i32
      %65 = arith.xori %63, %64 : i1
      %66 = arith.andi %65, %62 : i1
      %67 = arith.addi %61, %60 : i32
      %68 = arith.select %66, %67, %61 : i32
      %c128_i32_35 = arith.constant 128 : i32
      %69 = arith.muli %57, %c128_i32_35 : i32
      %c0_i32_36 = arith.constant 0 : i32
      %c128_i32_37 = arith.constant 128 : i32
      %70 = arith.addi %c0_i32_36, %c128_i32_37 : i32
      %c1_i32_38 = arith.constant 1 : i32
      scf.for %arg10 = %c0_i32_36 to %70 step %c1_i32_38  : i32 {
        %71 = arith.addi %69, %arg10 : i32
        %72 = arith.index_cast %71 : i32 to index
        %73 = memref.load %arg1[%72] : memref<128xi32, #tpu.memory_space<smem>>
        %c0_i32_40 = arith.constant 0 : i32
        %74 = tpu.memref_slice %arg2[%73, %c0_i32_40] : memref<512x128xf32, #tpu.memory_space<any>> -> memref<1x128xf32, #tpu.memory_space<any>>
        %c0_i32_41 = arith.constant 0 : i32
        %75 = tpu.memref_slice %arg8[%68, %arg10, %c0_i32_41] : memref<2x128x128xf32, #tpu.memory_space<vmem>> -> memref<1x1x128xf32, #tpu.memory_space<vmem>>
        %76 = tpu.memref_squeeze %75 : memref<1x1x128xf32, #tpu.memory_space<vmem>> -> memref<1x128xf32, #tpu.memory_space<vmem>>
        %77 = tpu.memref_slice %arg9[%68] : memref<2x!tpu.dma_semaphore, #tpu.memory_space<semaphore_mem>> -> memref<1x!tpu.dma_semaphore, #tpu.memory_space<semaphore_mem>>
        %78 = tpu.memref_squeeze %77 : memref<1x!tpu.dma_semaphore, #tpu.memory_space<semaphore_mem>> -> memref<!tpu.dma_semaphore, #tpu.memory_space<semaphore_mem>>
        tpu.enqueue_dma source(%74 : memref<1x128xf32, #tpu.memory_space<any>>) target(%76 : memref<1x128xf32, #tpu.memory_space<vmem>>) target_semaphore(%78 : memref<!tpu.dma_semaphore, #tpu.memory_space<semaphore_mem>>)
      }
      %c128_i32_39 = arith.constant 128 : i32
    } else {
    }
    %7 = tpu.iota {dimensions = array<i32: 1>} : vector<128x72xi32>
    %c0 = arith.constant 0 : index
    %c0_3 = arith.constant 0 : index
    %8 = vector.load %arg3[%c0, %c0_3] : memref<128x2xi32, #tpu.memory_space<vmem>>, vector<128x1xi32>
    %c0_4 = arith.constant 0 : index
    %c1 = arith.constant 1 : index
    %9 = vector.load %arg3[%c0_4, %c1] : memref<128x2xi32, #tpu.memory_space<vmem>>, vector<128x1xi32>
    %10 = vector.broadcast %8 : vector<128x1xi32> to vector<128x72xi32>
    %11 = arith.cmpi eq, %7, %10 : vector<128x72xi32>
    %12 = vector.broadcast %9 : vector<128x1xi32> to vector<128x72xi32>
    %13 = arith.cmpi eq, %7, %12 : vector<128x72xi32>
    %14 = arith.ori %11, %13 : vector<128x72xi1>
    %15 = arith.extui %14 : vector<128x72xi1> to vector<128x72xi32>
    %16 = arith.sitofp %15 : vector<128x72xi32> to vector<128x72xf32>
    %c0_5 = arith.constant 0 : index
    %c0_6 = arith.constant 0 : index
    %17 = vector.load %arg4[%c0_5, %c0_6] : memref<72x128xf32, #tpu.memory_space<vmem>>, vector<72x128xf32>
    %cst = arith.constant dense<0.000000e+00> : vector<128x128xf32>
    %18 = tpu.matmul %16, %17, %cst {dimension_numbers = #tpu.dot_dimension_numbers<[1], [0], [0], [1], [0, 0, 1, 1], [], []>} : vector<128x72xf32>, vector<72x128xf32>, vector<128x128xf32> -> vector<128x128xf32>
    %c2_i32 = arith.constant 2 : i32
    %c0_i32_7 = arith.constant 0 : i32
    %19 = arith.cmpi eq, %c2_i32, %c0_i32_7 : i32
    %c1_i32_8 = arith.constant 1 : i32
    %20 = arith.select %19, %c1_i32_8, %c2_i32 : i32
    %21 = arith.remsi %arg0, %20 : i32
    %c0_i32_9 = arith.constant 0 : i32
    %22 = arith.cmpi ne, %21, %c0_i32_9 : i32
    %c0_i32_10 = arith.constant 0 : i32
    %23 = arith.cmpi slt, %21, %c0_i32_10 : i32
    %c0_i32_11 = arith.constant 0 : i32
    %24 = arith.cmpi slt, %20, %c0_i32_11 : i32
    %25 = arith.xori %23, %24 : i1
    %26 = arith.andi %25, %22 : i1
    %27 = arith.addi %21, %20 : i32
    %28 = arith.select %26, %27, %21 : i32
    %c0_i32_12 = arith.constant 0 : i32
    %c128_i32 = arith.constant 128 : i32
    %29 = arith.addi %c0_i32_12, %c128_i32 : i32
    %c1_i32_13 = arith.constant 1 : i32
    scf.for %arg10 = %c0_i32_12 to %29 step %c1_i32_13  : i32 {
      %c0_i32_27 = arith.constant 0 : i32
      %c0_i32_28 = arith.constant 0 : i32
      %57 = tpu.memref_slice %arg2[%c0_i32_27, %c0_i32_28] : memref<512x128xf32, #tpu.memory_space<any>> -> memref<1x128xf32, #tpu.memory_space<any>>
      %c0_i32_29 = arith.constant 0 : i32
      %c0_i32_30 = arith.constant 0 : i32
      %58 = tpu.memref_slice %arg8[%28, %c0_i32_29, %c0_i32_30] : memref<2x128x128xf32, #tpu.memory_space<vmem>> -> memref<1x1x128xf32, #tpu.memory_space<vmem>>
      %59 = tpu.memref_squeeze %58 : memref<1x1x128xf32, #tpu.memory_space<vmem>> -> memref<1x128xf32, #tpu.memory_space<vmem>>
      %60 = tpu.memref_slice %arg9[%28] : memref<2x!tpu.dma_semaphore, #tpu.memory_space<semaphore_mem>> -> memref<1x!tpu.dma_semaphore, #tpu.memory_space<semaphore_mem>>
      %61 = tpu.memref_squeeze %60 : memref<1x!tpu.dma_semaphore, #tpu.memory_space<semaphore_mem>> -> memref<!tpu.dma_semaphore, #tpu.memory_space<semaphore_mem>>
      tpu.wait_dma2 semaphore(%61 : memref<!tpu.dma_semaphore, #tpu.memory_space<semaphore_mem>>) src(%57 : memref<1x128xf32, #tpu.memory_space<any>>) dst(%59 : memref<1x128xf32, #tpu.memory_space<vmem>>)
    }
    %30 = arith.index_cast %28 : i32 to index
    %c0_14 = arith.constant 0 : index
    %c0_15 = arith.constant 0 : index
    %31 = vector.load %arg8[%30, %c0_14, %c0_15] : memref<2x128x128xf32, #tpu.memory_space<vmem>>, vector<1x128x128xf32>
    %32 = vector.shape_cast %31 : vector<1x128x128xf32> to vector<128x128xf32>
    %33 = arith.addf %32, %18 : vector<128x128xf32>
    %cst_16 = arith.constant dense<0.000000e+00> : vector<128xf32>
    %34 = vector.multi_reduction <add>, %33, %cst_16 [1] : vector<128x128xf32> to vector<128xf32>
    %35 = vector.shape_cast %34 : vector<128xf32> to vector<128x1xf32>
    %cst_17 = arith.constant 1.280000e+02 : f32
    %36 = vector.broadcast %cst_17 : f32 to vector<128x1xf32>
    %37 = arith.divf %35, %36 : vector<128x1xf32>
    %38 = vector.broadcast %37 : vector<128x1xf32> to vector<128x128xf32>
    %39 = arith.subf %33, %38 : vector<128x128xf32>
    %40 = arith.mulf %39, %39 : vector<128x128xf32>
    %cst_18 = arith.constant dense<0.000000e+00> : vector<128xf32>
    %41 = vector.multi_reduction <add>, %40, %cst_18 [1] : vector<128x128xf32> to vector<128xf32>
    %42 = vector.shape_cast %41 : vector<128xf32> to vector<128x1xf32>
    %cst_19 = arith.constant 1.280000e+02 : f32
    %43 = vector.broadcast %cst_19 : f32 to vector<128x1xf32>
    %44 = arith.divf %42, %43 : vector<128x1xf32>
    %cst_20 = arith.constant 9.99999974E-6 : f32
    %45 = vector.broadcast %cst_20 : f32 to vector<128x1xf32>
    %46 = arith.addf %44, %45 : vector<128x1xf32>
    %47 = math.rsqrt %46 : vector<128x1xf32>
    %48 = vector.broadcast %47 : vector<128x1xf32> to vector<128x128xf32>
    %49 = arith.mulf %39, %48 : vector<128x128xf32>
    %c0_21 = arith.constant 0 : index
    %c0_22 = arith.constant 0 : index
    %50 = vector.load %arg5[%c0_21, %c0_22] : memref<1x128xf32, #tpu.memory_space<vmem>>, vector<1x128xf32>
    %51 = vector.broadcast %50 : vector<1x128xf32> to vector<128x128xf32>
    %52 = arith.mulf %49, %51 : vector<128x128xf32>
    %c0_23 = arith.constant 0 : index
    %c0_24 = arith.constant 0 : index
    %53 = vector.load %arg6[%c0_23, %c0_24] : memref<1x128xf32, #tpu.memory_space<vmem>>, vector<1x128xf32>
    %54 = vector.broadcast %53 : vector<1x128xf32> to vector<128x128xf32>
    %55 = arith.addf %52, %54 : vector<128x128xf32>
    %c0_25 = arith.constant 0 : index
    %c0_26 = arith.constant 0 : index
    %56 = vector.load %arg7[%c0_25, %c0_26] : memref<128x128xf32, #tpu.memory_space<vmem>>, vector<128x128xf32>
    tpu.vector_store %arg7[%c0_25, %c0_26], %55 {strides = array<i32>} : memref<128x128xf32, #tpu.memory_space<vmem>>, vector<128x128xf32>,
    return
  }
  func.func @transform_1(%arg0: i32, %arg1: memref<128xi32, #tpu.memory_space<smem>>) -> (i32, i32) {
    %c0_i32 = arith.constant 0 : i32
    %c0_i32_0 = arith.constant 0 : i32
    return %arg0, %c0_i32 : i32, i32
  }
  func.func @transform_2(%arg0: i32, %arg1: memref<128xi32, #tpu.memory_space<smem>>) -> (i32, i32) {
    %c0_i32 = arith.constant 0 : i32
    %c0_i32_0 = arith.constant 0 : i32
    %c0_i32_1 = arith.constant 0 : i32
    return %c0_i32, %c0_i32_0 : i32, i32
  }
  func.func @transform_3(%arg0: i32, %arg1: memref<128xi32, #tpu.memory_space<smem>>) -> (i32, i32) {
    %c0_i32 = arith.constant 0 : i32
    %c0_i32_0 = arith.constant 0 : i32
    %c0_i32_1 = arith.constant 0 : i32
    return %c0_i32, %c0_i32_0 : i32, i32
  }
  func.func @transform_4(%arg0: i32, %arg1: memref<128xi32, #tpu.memory_space<smem>>) -> (i32, i32) {
    %c0_i32 = arith.constant 0 : i32
    %c0_i32_0 = arith.constant 0 : i32
    %c0_i32_1 = arith.constant 0 : i32
    return %c0_i32, %c0_i32_0 : i32, i32
  }
  func.func @transform_5(%arg0: i32, %arg1: memref<128xi32, #tpu.memory_space<smem>>) -> (i32, i32) {
    %c0_i32 = arith.constant 0 : i32
    %c0_i32_0 = arith.constant 0 : i32
    return %arg0, %c0_i32 : i32, i32
  }
}

</mosaic_0001>

<llo_original>
// kernel: tpu_custom_call.1
$region0: #{tpu_custom_call.1}
  #allocation0 [shape = 'u32[]', space=smem, size = 0x4, offset = 0x4, fixed_abs, tag = 'smem constant byte address 0x4 - core index']
  #allocation1 [shape = 'u32[72,128]{1,0:T(1,128)}', space=vmem, size = 0x9000, scoped, tag = 'internal scratch']
  #allocation2 [shape = 'f32[2,128,128]{2,1,0:T(8,128)}', space=vmem, size = 0x20000, scoped, tag = 'scratch operand']
  #allocation3 [shape = 's32[2]{0}', space=sflag, size = 0x8, scoped, tag = 'scratch operand']
  #allocation4 [shape = 's32[1]{0}', space=sflag, size = 0x4, scoped, tag = 'scoped memory for tpu_custom_call.1']
  #allocation5 [shape = 'u8[512]{0}', space=smem, size = 0x200, scoped, tag = 'prefetched SMEM operand 0']
  #allocation8 [shape = 's32[]', space=sflag, size = 0x4, offset = 0, fixed_abs, tag = 'sflag constant byte address 0x0 - dummy sync flag']
  #allocation9 [shape = 's32[]', space=sflag, size = 0x4, offset = 0, fixed_abs, tag = 'sflag constant byte address 0x0 - dummy sync flag']
  #allocation10 [shape = 'u32[]', space=smem, size = 0x4, offset = 0x44, fixed_abs, tag = 'smem constant byte address 0x44 - assertion arg 0']
  #allocation11 [shape = 'u32[]', space=smem, size = 0x4, offset = 0x48, fixed_abs, tag = 'smem constant byte address 0x48 - assertion arg 1']
  #allocation12 [shape = 's32[]', space=sflag, size = 0x4, offset = 0, fixed_abs, tag = 'sflag constant byte address 0x0 - dummy sync flag']
  #allocation13 [shape = 's32[]', space=sflag, size = 0x4, offset = 0, fixed_abs, tag = 'sflag constant byte address 0x0 - dummy sync flag']
  %s0 = inlined_call_operand.vmem [shape: s32[128], index: 0, kind: input, shape index: {}]
  %s1 = inlined_call_operand.hbm [shape: f32[512,128], index: 1, kind: input, shape index: {}]
  %s2 = inlined_call_operand.vmem [shape: s32[128,2], index: 2, kind: input, shape index: {}]
  %s3 = inlined_call_operand.vmem [shape: f32[72,128], index: 3, kind: input, shape index: {}]
  %s4 = inlined_call_operand.vmem [shape: f32[1,128], index: 4, kind: input, shape index: {}]
  %s5 = inlined_call_operand.vmem [shape: f32[1,128], index: 5, kind: input, shape index: {}]
  %s6 = inlined_call_operand.hbm [shape: f32[128,128], index: 6, kind: output, shape index: {}]
  %s7 = sld [smem:[#allocation0]]
  $region63: #{tpu_custom_call.1} parent=0
    _
  %s9 = ssub.s32 1, %s7
  %s10 = scalar_select 0, %s9, %s7
  %s12 = sshll.u32 %s0, 4
  %s13 = int_to_ptr.vmem [resolvable:$true] %s12
  %15 = dma.vmem_to_smem %s13, 16, [#allocation5], [#allocation4]
  %17 = dma.done [#allocation4], 16
  %18 = sfence
  $region1: #{tpu_custom_call.1} parent=0
    #allocation6 [shape = 'u8[65536]{0}', space=vmem, size = 0x10000, scoped, tag = 'output window, operand 0, single buffered']
    #allocation7 [shape = 's32[1]{0}', space=sflag, size = 0x4, scoped, tag = 'scoped memory for tpu_custom_call.1']
    %19 = vsyncpa [#allocation7], 0
    // Predicated region
    $region2: #{tpu_custom_call.1} parent=1 // pred_check
      _
    $region3: #{tpu_custom_call.1} parent=1 // pred_check_branch
      %21 = sbr.rel (0) target = $region5
    $region4: #{tpu_custom_call.1} parent=1 // pred_region
      _
    $region5: #{tpu_custom_call.1} parent=1 // pred_fallthru
      _
    // Predicated region
    $region6: #{tpu_custom_call.1} parent=1 // pred_check
      _
    $region7: #{tpu_custom_call.1} parent=1 // pred_check_branch
      %23 = sbr.rel (0) target = $region9
    $region8: #{tpu_custom_call.1} parent=1 // pred_region
      _
    $region9: #{tpu_custom_call.1} parent=1 // pred_fallthru
      _
    // Predicated region
    $region10: #{tpu_custom_call.1} parent=1 // pred_check
      _
    $region11: #{tpu_custom_call.1} parent=1 // pred_check_branch
      %25 = sbr.rel (0) target = $region13
    $region12: #{tpu_custom_call.1} parent=1 // pred_region
      _
    $region13: #{tpu_custom_call.1} parent=1 // pred_fallthru
      _
    // Predicated region
    $region14: #{tpu_custom_call.1} parent=1 // pred_check
      _
    $region15: #{tpu_custom_call.1} parent=1 // pred_check_branch
      %27 = sbr.rel (0) target = $region17
    $region16: #{tpu_custom_call.1} parent=1 // pred_region
      _
    $region17: #{tpu_custom_call.1} parent=1 // pred_fallthru
      _
    %p28 = scmp.eq.s32.totalorder 0, 0
    // Predicated region
    $region18: #{tpu_custom_call.1} parent=1 // pred_check
      %p29 = pneg %p28
    $region19: #{tpu_custom_call.1} parent=1 // pred_check_branch
      %31 = sbr.rel (%p29) target = $region21
    $region20: #{tpu_custom_call.1} parent=1 // pred_region
      loop: start=0, step=1, limit=128
      $region22: #{tpu_custom_call.1} parent=20 // loop_pre_header
        _
      $region23: #{tpu_custom_call.1} parent=20 // loop_header
        %s33 = sphi 0, %s37
        %p34 = scmp.ge.s32.totalorder %s33, 128
      $region24: #{tpu_custom_call.1} parent=20 // loop_header_branch
        %36 = sbr.rel (%p34) target = $region28
      $region25: #{tpu_custom_call.1} parent=20 // loop_body
        %s38 = sld [smem:[#allocation5 + %s33]]
        %s39 = scalar_lea.hbm %s1, %s38
        %s40 = scalar_lea.vmem [#allocation2], %s33
        // Predicated region
        $region29: #{tpu_custom_call.1} parent=25 // pred_check
          _
        $region30: #{tpu_custom_call.1} parent=25 // pred_check_branch
          %42 = sbr.rel target = $region32
        $region31: #{tpu_custom_call.1} parent=25 // pred_region
          %43 = sst [smem:[#allocation10]] [#allocation9]
          %44 = sst [smem:[#allocation11]] [#allocation8]
        $region32: #{tpu_custom_call.1} parent=25 // pred_fallthru
          _
        %46 = shalt.err (0)
        %s48 = sshll.u32 %s39, 4
        %s49 = int_to_ptr.hbm [resolvable:$true] %s48
        %s50 = sshll.u32 %s40, 4
        %s51 = int_to_ptr.vmem [resolvable:$true] %s50
        %53 = dma.hbm_to_vmem [thread:$0]  %s49, 16, %s51, [#allocation3]
      $region26: #{tpu_custom_call.1} parent=20 // loop_footer
        %s37 = sadd.s32 1, %s33
      $region27: #{tpu_custom_call.1} parent=20 // loop_footer_branch
        %32 = sbr.rel target = $region23
      $region28: #{tpu_custom_call.1} parent=20 // loop_exit
        _
    $region21: #{tpu_custom_call.1} parent=1 // pred_fallthru
      _
    %s54 = sadd.s32 0, 1
    %p55 = scmp.lt.s32.totalorder %s54, 1
    // Predicated region
    $region33: #{tpu_custom_call.1} parent=1 // pred_check
      %p56 = pneg %p55
    $region34: #{tpu_custom_call.1} parent=1 // pred_check_branch
      %58 = sbr.rel (%p56) target = $region36
    $region35: #{tpu_custom_call.1} parent=1 // pred_region
      %p59 = scmp.lt.s32.totalorder %s54, 0
      %s60 = ssub.s32 0, %s54
      %s61 = scalar_select %p59, %s60, %s54
      %s62 = sand.u32 %s61, 1
      %s63 = ssub.s32 0, %s62
      %s64 = scalar_select %p59, %s63, %s62
      %p65 = scmp.ne.s32.totalorder %s64, 0
      %p66 = scmp.lt.s32.totalorder %s64, 0
      %p67 = pnand %p66, %p65
      %p68 = pneg %p67
      %s69 = sadd.s32 %s64, 2
      %s70 = scalar_select %p68, %s69, %s64
      %s71 = smul.u32 %s54, 128
      loop: start=0, step=1, limit=128
      $region37: #{tpu_custom_call.1} parent=35 // loop_pre_header
        _
      $region38: #{tpu_custom_call.1} parent=35 // loop_header
        %s73 = sphi 0, %s77
        %p74 = scmp.ge.s32.totalorder %s73, 128
      $region39: #{tpu_custom_call.1} parent=35 // loop_header_branch
        %76 = sbr.rel (%p74) target = $region43
      $region40: #{tpu_custom_call.1} parent=35 // loop_body
        %s78 = sadd.s32 %s71, %s73
        %s79 = sld [smem:[#allocation5 + %s78]]
        %s80 = scalar_lea.hbm %s1, %s79
        %s81 = smul.u32 %s70, 128
        %s82 = sadd.s32 %s73, %s81
        %s83 = scalar_lea.vmem [#allocation2], %s82
        %s84 = scalar_lea.sflag [#allocation3], %s70
        // Predicated region
        $region44: #{tpu_custom_call.1} parent=40 // pred_check
          _
        $region45: #{tpu_custom_call.1} parent=40 // pred_check_branch
          %86 = sbr.rel target = $region47
        $region46: #{tpu_custom_call.1} parent=40 // pred_region
          %87 = sst [smem:[#allocation10]] [#allocation13]
          %88 = sst [smem:[#allocation11]] [#allocation12]
        $region47: #{tpu_custom_call.1} parent=40 // pred_fallthru
          _
        %90 = shalt.err (0)
        %s92 = sshll.u32 %s80, 4
        %s93 = int_to_ptr.hbm [resolvable:$true] %s92
        %s94 = sshll.u32 %s83, 4
        %s95 = int_to_ptr.vmem [resolvable:$true] %s94
        %97 = dma.hbm_to_vmem [thread:$0]  %s93, 16, %s95, %s84
      $region41: #{tpu_custom_call.1} parent=35 // loop_footer
        %s77 = sadd.s32 1, %s73
      $region42: #{tpu_custom_call.1} parent=35 // loop_footer_branch
        %72 = sbr.rel target = $region38
      $region43: #{tpu_custom_call.1} parent=35 // loop_exit
        _
    $region36: #{tpu_custom_call.1} parent=1 // pred_fallthru
      _
    %v98 = vlaneseq
    %v99 = vand.u32 %v98, 127
    %v100 = vld [vmem:[%s2] sm:$0xff]
    %v101 = vld [vmem:[%s2 + $0x8] sm:$0xff]
    %v102 = vld [vmem:[%s2 + $0x10] sm:$0xff]
    %v103 = vld [vmem:[%s2 + $0x18] sm:$0xff]
    %v104 = vld [vmem:[%s2 + $0x20] sm:$0xff]
    %v105 = vld [vmem:[%s2 + $0x28] sm:$0xff]
    %v106 = vld [vmem:[%s2 + $0x30] sm:$0xff]
    %v107 = vld [vmem:[%s2 + $0x38] sm:$0xff]
    %v108 = vld [vmem:[%s2 + $0x40] sm:$0xff]
    %v109 = vld [vmem:[%s2 + $0x48] sm:$0xff]
    %v110 = vld [vmem:[%s2 + $0x50] sm:$0xff]
    %v111 = vld [vmem:[%s2 + $0x58] sm:$0xff]
    %v112 = vld [vmem:[%s2 + $0x60] sm:$0xff]
    %v113 = vld [vmem:[%s2 + $0x68] sm:$0xff]
    %v114 = vld [vmem:[%s2 + $0x70] sm:$0xff]
    %v115 = vld [vmem:[%s2 + $0x78] sm:$0xff]
    %116 = vset.pattern.permute.xlu0 0
    %117 = vperm.xlu0 %116, %v100
    %v118 = vpop.permute.xlu0 %117
    %119 = vset.pattern.permute.xlu0 0
    %120 = vperm.xlu0 %119, %v101
    %v121 = vpop.permute.xlu0 %120
    %122 = vset.pattern.permute.xlu0 0
    %123 = vperm.xlu0 %122, %v102
    %v124 = vpop.permute.xlu0 %123
    %125 = vset.pattern.permute.xlu0 0
    %126 = vperm.xlu0 %125, %v103
    %v127 = vpop.permute.xlu0 %126
    %128 = vset.pattern.permute.xlu0 0
    %129 = vperm.xlu0 %128, %v104
    %v130 = vpop.permute.xlu0 %129
    %131 = vset.pattern.permute.xlu0 0
    %132 = vperm.xlu0 %131, %v105
    %v133 = vpop.permute.xlu0 %132
    %134 = vset.pattern.permute.xlu0 0
    %135 = vperm.xlu0 %134, %v106
    %v136 = vpop.permute.xlu0 %135
    %137 = vset.pattern.permute.xlu0 0
    %138 = vperm.xlu0 %137, %v107
    %v139 = vpop.permute.xlu0 %138
    %140 = vset.pattern.permute.xlu0 0
    %141 = vperm.xlu0 %140, %v108
    %v142 = vpop.permute.xlu0 %141
    %143 = vset.pattern.permute.xlu0 0
    %144 = vperm.xlu0 %143, %v109
    %v145 = vpop.permute.xlu0 %144
    %146 = vset.pattern.permute.xlu0 0
    %147 = vperm.xlu0 %146, %v110
    %v148 = vpop.permute.xlu0 %147
    %149 = vset.pattern.permute.xlu0 0
    %150 = vperm.xlu0 %149, %v111
    %v151 = vpop.permute.xlu0 %150
    %152 = vset.pattern.permute.xlu0 0
    %153 = vperm.xlu0 %152, %v112
    %v154 = vpop.permute.xlu0 %153
    %155 = vset.pattern.permute.xlu0 0
    %156 = vperm.xlu0 %155, %v113
    %v157 = vpop.permute.xlu0 %156
    %158 = vset.pattern.permute.xlu0 0
    %159 = vperm.xlu0 %158, %v114
    %v160 = vpop.permute.xlu0 %159
    %161 = vset.pattern.permute.xlu0 0
    %162 = vperm.xlu0 %161, %v115
    %v163 = vpop.permute.xlu0 %162
    %vm164 = vcmp.eq.s32.totalorder %v99, %v118
    %vm165 = vcmp.eq.s32.totalorder %v99, %v121
    %vm166 = vcmp.eq.s32.totalorder %v99, %v124
    %vm167 = vcmp.eq.s32.totalorder %v99, %v127
    %vm168 = vcmp.eq.s32.totalorder %v99, %v130
    %vm169 = vcmp.eq.s32.totalorder %v99, %v133
    %vm170 = vcmp.eq.s32.totalorder %v99, %v136
    %vm171 = vcmp.eq.s32.totalorder %v99, %v139
    %vm172 = vcmp.eq.s32.totalorder %v99, %v142
    %vm173 = vcmp.eq.s32.totalorder %v99, %v145
    %vm174 = vcmp.eq.s32.totalorder %v99, %v148
    %vm175 = vcmp.eq.s32.totalorder %v99, %v151
    %vm176 = vcmp.eq.s32.totalorder %v99, %v154
    %vm177 = vcmp.eq.s32.totalorder %v99, %v157
    %vm178 = vcmp.eq.s32.totalorder %v99, %v160
    %vm179 = vcmp.eq.s32.totalorder %v99, %v163
    %180 = vset.pattern.permute.xlu0 1
    %181 = vperm.xlu0 %180, %v100
    %v182 = vpop.permute.xlu0 %181
    %183 = vset.pattern.permute.xlu0 1
    %184 = vperm.xlu0 %183, %v101
    %v185 = vpop.permute.xlu0 %184
    %186 = vset.pattern.permute.xlu0 1
    %187 = vperm.xlu0 %186, %v102
    %v188 = vpop.permute.xlu0 %187
    %189 = vset.pattern.permute.xlu0 1
    %190 = vperm.xlu0 %189, %v103
    %v191 = vpop.permute.xlu0 %190
    %192 = vset.pattern.permute.xlu0 1
    %193 = vperm.xlu0 %192, %v104
    %v194 = vpop.permute.xlu0 %193
    %195 = vset.pattern.permute.xlu0 1
    %196 = vperm.xlu0 %195, %v105
    %v197 = vpop.permute.xlu0 %196
    %198 = vset.pattern.permute.xlu0 1
    %199 = vperm.xlu0 %198, %v106
    %v200 = vpop.permute.xlu0 %199
    %201 = vset.pattern.permute.xlu0 1
    %202 = vperm.xlu0 %201, %v107
    %v203 = vpop.permute.xlu0 %202
    %204 = vset.pattern.permute.xlu0 1
    %205 = vperm.xlu0 %204, %v108
    %v206 = vpop.permute.xlu0 %205
    %207 = vset.pattern.permute.xlu0 1
    %208 = vperm.xlu0 %207, %v109
    %v209 = vpop.permute.xlu0 %208
    %210 = vset.pattern.permute.xlu0 1
    %211 = vperm.xlu0 %210, %v110
    %v212 = vpop.permute.xlu0 %211
    %213 = vset.pattern.permute.xlu0 1
    %214 = vperm.xlu0 %213, %v111
    %v215 = vpop.permute.xlu0 %214
    %216 = vset.pattern.permute.xlu0 1
    %217 = vperm.xlu0 %216, %v112
    %v218 = vpop.permute.xlu0 %217
    %219 = vset.pattern.permute.xlu0 1
    %220 = vperm.xlu0 %219, %v113
    %v221 = vpop.permute.xlu0 %220
    %222 = vset.pattern.permute.xlu0 1
    %223 = vperm.xlu0 %222, %v114
    %v224 = vpop.permute.xlu0 %223
    %225 = vset.pattern.permute.xlu0 1
    %226 = vperm.xlu0 %225, %v115
    %v227 = vpop.permute.xlu0 %226
    %vm228 = vcmp.eq.s32.totalorder %v99, %v182
    %vm229 = vcmp.eq.s32.totalorder %v99, %v185
    %vm230 = vcmp.eq.s32.totalorder %v99, %v188
    %vm231 = vcmp.eq.s32.totalorder %v99, %v191
    %vm232 = vcmp.eq.s32.totalorder %v99, %v194
    %vm233 = vcmp.eq.s32.totalorder %v99, %v197
    %vm234 = vcmp.eq.s32.totalorder %v99, %v200
    %vm235 = vcmp.eq.s32.totalorder %v99, %v203
    %vm236 = vcmp.eq.s32.totalorder %v99, %v206
    %vm237 = vcmp.eq.s32.totalorder %v99, %v209
    %vm238 = vcmp.eq.s32.totalorder %v99, %v212
    %vm239 = vcmp.eq.s32.totalorder %v99, %v215
    %vm240 = vcmp.eq.s32.totalorder %v99, %v218
    %vm241 = vcmp.eq.s32.totalorder %v99, %v221
    %vm242 = vcmp.eq.s32.totalorder %v99, %v224
    %vm243 = vcmp.eq.s32.totalorder %v99, %v227
    %vm244 = vmor %vm164, %vm228
    %vm245 = vmor %vm165, %vm229
    %vm246 = vmor %vm166, %vm230
    %vm247 = vmor %vm167, %vm231
    %vm248 = vmor %vm168, %vm232
    %vm249 = vmor %vm169, %vm233
    %vm250 = vmor %vm170, %vm234
    %vm251 = vmor %vm171, %vm235
    %vm252 = vmor %vm172, %vm236
    %vm253 = vmor %vm173, %vm237
    %vm254 = vmor %vm174, %vm238
    %vm255 = vmor %vm175, %vm239
    %vm256 = vmor %vm176, %vm240
    %vm257 = vmor %vm177, %vm241
    %vm258 = vmor %vm178, %vm242
    %vm259 = vmor %vm179, %vm243
    %v260 = vsel %vm244, 1, 0
    %v261 = vsel %vm245, 1, 0
    %v262 = vsel %vm246, 1, 0
    %v263 = vsel %vm247, 1, 0
    %v264 = vsel %vm248, 1, 0
    %v265 = vsel %vm249, 1, 0
    %v266 = vsel %vm250, 1, 0
    %v267 = vsel %vm251, 1, 0
    %v268 = vsel %vm252, 1, 0
    %v269 = vsel %vm253, 1, 0
    %v270 = vsel %vm254, 1, 0
    %v271 = vsel %vm255, 1, 0
    %v272 = vsel %vm256, 1, 0
    %v273 = vsel %vm257, 1, 0
    %v274 = vsel %vm258, 1, 0
    %v275 = vsel %vm259, 1, 0
    %v276 = vcvt.s32.f32 %v260
    %v277 = vcvt.s32.f32 %v261
    %v278 = vcvt.s32.f32 %v262
    %v279 = vcvt.s32.f32 %v263
    %v280 = vcvt.s32.f32 %v264
    %v281 = vcvt.s32.f32 %v265
    %v282 = vcvt.s32.f32 %v266
    %v283 = vcvt.s32.f32 %v267
    %v284 = vcvt.s32.f32 %v268
    %v285 = vcvt.s32.f32 %v269
    %v286 = vcvt.s32.f32 %v270
    %v287 = vcvt.s32.f32 %v271
    %v288 = vcvt.s32.f32 %v272
    %v289 = vcvt.s32.f32 %v273
    %v290 = vcvt.s32.f32 %v274
    %v291 = vcvt.s32.f32 %v275
    %v292 = vld [vmem:[%s3] sm:$0xff]
    %v293 = vld [vmem:[%s3 + $0x8] sm:$0xff]
    %v294 = vld [vmem:[%s3 + $0x10] sm:$0xff]
    %v295 = vld [vmem:[%s3 + $0x18] sm:$0xff]
    %v296 = vld [vmem:[%s3 + $0x20] sm:$0xff]
    %v297 = vld [vmem:[%s3 + $0x28] sm:$0xff]
    %v298 = vld [vmem:[%s3 + $0x30] sm:$0xff]
    %v299 = vld [vmem:[%s3 + $0x38] sm:$0xff]
    %v300 = vld [vmem:[%s3 + $0x40] sm:$0xff]
    %vm301 = vcmask 588800
    %v303 = vsel %vm301, %v276, 0
    %v306 = vsel %vm301, %v277, 0
    %v309 = vsel %vm301, %v278, 0
    %v312 = vsel %vm301, %v279, 0
    %v315 = vsel %vm301, %v280, 0
    %v318 = vsel %vm301, %v281, 0
    %v321 = vsel %vm301, %v282, 0
    %v324 = vsel %vm301, %v283, 0
    %v327 = vsel %vm301, %v284, 0
    %v330 = vsel %vm301, %v285, 0
    %v333 = vsel %vm301, %v286, 0
    %v336 = vsel %vm301, %v287, 0
    %v339 = vsel %vm301, %v288, 0
    %v342 = vsel %vm301, %v289, 0
    %v345 = vsel %vm301, %v290, 0
    %v348 = vsel %vm301, %v291, 0
    %350 = vmatpush.msra.mxu0 0.0
    %351 = vmatpush.msra.mxu0 0.0
    %352 = vmatpush.msra.mxu0 0.0
    %353 = vmatpush.msra.mxu0 0.0
    %354 = vmatpush.msra.mxu0 0.0
    %355 = vmatpush.msra.mxu0 0.0
    %356 = vmatpush.msra.mxu0 0.0
    %357 = vmatpush.msra.mxu0 %v300
    %358 = vmatpush.msra.mxu0 %v299
    %359 = vmatpush.msra.mxu0 %v298
    %360 = vmatpush.msra.mxu0 %v297
    %361 = vmatpush.msra.mxu0 %v296
    %362 = vmatpush.msra.mxu0 %v295
    %363 = vmatpush.msra.mxu0 %v294
    %364 = vmatpush.msra.mxu0 %v293
    %365 = vmatpush.msra.mxu0 %v292
    %366 = vmatmul.f32.gmra.mxu0 %v303
    %v367 = vpop.f32.mrf.mxu0
    %v368 = vadd.f32 0.0, %v367
    %369 = vmatmul.f32.gmra.mxu0 %v306
    %v370 = vpop.f32.mrf.mxu0
    %v371 = vadd.f32 0.0, %v370
    %372 = vmatmul.f32.gmra.mxu0 %v309
    %v373 = vpop.f32.mrf.mxu0
    %v374 = vadd.f32 0.0, %v373
    %375 = vmatmul.f32.gmra.mxu0 %v312
    %v376 = vpop.f32.mrf.mxu0
    %v377 = vadd.f32 0.0, %v376
    %378 = vmatmul.f32.gmra.mxu0 %v315
    %v379 = vpop.f32.mrf.mxu0
    %v380 = vadd.f32 0.0, %v379
    %381 = vmatmul.f32.gmra.mxu0 %v318
    %v382 = vpop.f32.mrf.mxu0
    %v383 = vadd.f32 0.0, %v382
    %384 = vmatmul.f32.gmra.mxu0 %v321
    %v385 = vpop.f32.mrf.mxu0
    %v386 = vadd.f32 0.0, %v385
    %387 = vmatmul.f32.gmra.mxu0 %v324
    %v388 = vpop.f32.mrf.mxu0
    %v389 = vadd.f32 0.0, %v388
    %390 = vmatmul.f32.gmra.mxu0 %v327
    %v391 = vpop.f32.mrf.mxu0
    %v392 = vadd.f32 0.0, %v391
    %393 = vmatmul.f32.gmra.mxu0 %v330
    %v394 = vpop.f32.mrf.mxu0
    %v395 = vadd.f32 0.0, %v394
    %396 = vmatmul.f32.gmra.mxu0 %v333
    %v397 = vpop.f32.mrf.mxu0
    %v398 = vadd.f32 0.0, %v397
    %399 = vmatmul.f32.gmra.mxu0 %v336
    %v400 = vpop.f32.mrf.mxu0
    %v401 = vadd.f32 0.0, %v400
    %402 = vmatmul.f32.gmra.mxu0 %v339
    %v403 = vpop.f32.mrf.mxu0
    %v404 = vadd.f32 0.0, %v403
    %405 = vmatmul.f32.gmra.mxu0 %v342
    %v406 = vpop.f32.mrf.mxu0
    %v407 = vadd.f32 0.0, %v406
    %408 = vmatmul.f32.gmra.mxu0 %v345
    %v409 = vpop.f32.mrf.mxu0
    %v410 = vadd.f32 0.0, %v409
    %411 = vmatmul.f32.gmra.mxu0 %v348
    %v412 = vpop.f32.mrf.mxu0
    %v413 = vadd.f32 0.0, %v412
    %414 = vdwg.mxu0
    %s415 = ssub.s32 0, 0
    %s416 = ssub.s32 0, 0
    %p417 = scmp.ne.s32.totalorder 0, 0
    %p418 = scmp.lt.s32.totalorder 0, 0
    %p419 = pnand %p418, %p417
    %p420 = pneg %p419
    %s421 = sadd.s32 0, 2
    %s422 = scalar_select %p420, %s421, 0
    loop: start=0, step=1, limit=128
    $region48: #{tpu_custom_call.1} parent=1 // loop_pre_header
      _
    $region49: #{tpu_custom_call.1} parent=1 // loop_header
      %s424 = sphi 0, %s428
      %p425 = scmp.ge.s32.totalorder %s424, 128
    $region50: #{tpu_custom_call.1} parent=1 // loop_header_branch
      %427 = sbr.rel (%p425) target = $region54
    $region51: #{tpu_custom_call.1} parent=1 // loop_body
      %s429 = scalar_lea.sflag [#allocation3], %s422
      %s430 = smul.u32 1, 1
      %s431 = sshll.u32 %s430, 4
      %432 = dma.done %s429, %s431
    $region52: #{tpu_custom_call.1} parent=1 // loop_footer
      %s428 = sadd.s32 1, %s424
    $region53: #{tpu_custom_call.1} parent=1 // loop_footer_branch
      %423 = sbr.rel target = $region49
    $region54: #{tpu_custom_call.1} parent=1 // loop_exit
      _
    %s433 = smul.u32 %s422, 128
    %s434 = scalar_lea.vmem [#allocation2], %s433
    %v435 = vld [vmem:[%s434] sm:$0xff]
    %v436 = vld [vmem:[%s434 + $0x8] sm:$0xff]
    %v437 = vld [vmem:[%s434 + $0x10] sm:$0xff]
    %v438 = vld [vmem:[%s434 + $0x18] sm:$0xff]
    %v439 = vld [vmem:[%s434 + $0x20] sm:$0xff]
    %v440 = vld [vmem:[%s434 + $0x28] sm:$0xff]
    %v441 = vld [vmem:[%s434 + $0x30] sm:$0xff]
    %v442 = vld [vmem:[%s434 + $0x38] sm:$0xff]
    %v443 = vld [vmem:[%s434 + $0x40] sm:$0xff]
    %v444 = vld [vmem:[%s434 + $0x48] sm:$0xff]
    %v445 = vld [vmem:[%s434 + $0x50] sm:$0xff]
    %v446 = vld [vmem:[%s434 + $0x58] sm:$0xff]
    %v447 = vld [vmem:[%s434 + $0x60] sm:$0xff]
    %v448 = vld [vmem:[%s434 + $0x68] sm:$0xff]
    %v449 = vld [vmem:[%s434 + $0x70] sm:$0xff]
    %v450 = vld [vmem:[%s434 + $0x78] sm:$0xff]
    %v451 = vadd.f32 %v435, %v368
    %v452 = vadd.f32 %v436, %v371
    %v453 = vadd.f32 %v437, %v374
    %v454 = vadd.f32 %v438, %v377
    %v455 = vadd.f32 %v439, %v380
    %v456 = vadd.f32 %v440, %v383
    %v457 = vadd.f32 %v441, %v386
    %v458 = vadd.f32 %v442, %v389
    %v459 = vadd.f32 %v443, %v392
    %v460 = vadd.f32 %v444, %v395
    %v461 = vadd.f32 %v445, %v398
    %v462 = vadd.f32 %v446, %v401
    %v463 = vadd.f32 %v447, %v404
    %v464 = vadd.f32 %v448, %v407
    %v465 = vadd.f32 %v449, %v410
    %v466 = vadd.f32 %v450, %v413
    %467 = vadd.xlane.f32.xlu0 %v451
    %v468 = vpop.xlane.xlu0 %467
    %469 = vadd.xlane.f32.xlu0 %v452
    %v470 = vpop.xlane.xlu0 %469
    %471 = vadd.xlane.f32.xlu0 %v453
    %v472 = vpop.xlane.xlu0 %471
    %473 = vadd.xlane.f32.xlu0 %v454
    %v474 = vpop.xlane.xlu0 %473
    %475 = vadd.xlane.f32.xlu0 %v455
    %v476 = vpop.xlane.xlu0 %475
    %477 = vadd.xlane.f32.xlu0 %v456
    %v478 = vpop.xlane.xlu0 %477
    %479 = vadd.xlane.f32.xlu0 %v457
    %v480 = vpop.xlane.xlu0 %479
    %481 = vadd.xlane.f32.xlu0 %v458
    %v482 = vpop.xlane.xlu0 %481
    %483 = vadd.xlane.f32.xlu0 %v459
    %v484 = vpop.xlane.xlu0 %483
    %485 = vadd.xlane.f32.xlu0 %v460
    %v486 = vpop.xlane.xlu0 %485
    %487 = vadd.xlane.f32.xlu0 %v461
    %v488 = vpop.xlane.xlu0 %487
    %489 = vadd.xlane.f32.xlu0 %v462
    %v490 = vpop.xlane.xlu0 %489
    %491 = vadd.xlane.f32.xlu0 %v463
    %v492 = vpop.xlane.xlu0 %491
    %493 = vadd.xlane.f32.xlu0 %v464
    %v494 = vpop.xlane.xlu0 %493
    %495 = vadd.xlane.f32.xlu0 %v465
    %v496 = vpop.xlane.xlu0 %495
    %497 = vadd.xlane.f32.xlu0 %v466
    %v498 = vpop.xlane.xlu0 %497
    %v499 = vrcp.pop 128.0
    %v500 = vmul.f32 128.0, %v499
    %v501 = vsub.f32 1.0, %v500
    %v502 = vmul.f32 %v499, %v501
    %v503 = vadd.f32 %v499, %v502
    %vm504 = vweird.f32 %v499
    %v505 = vsel %vm504, %v499, %v503
    %v506 = vmul.f32 %v468, %v505
    %v507 = vmul.f32 %v470, %v505
    %v508 = vmul.f32 %v472, %v505
    %v509 = vmul.f32 %v474, %v505
    %v510 = vmul.f32 %v476, %v505
    %v511 = vmul.f32 %v478, %v505
    %v512 = vmul.f32 %v480, %v505
    %v513 = vmul.f32 %v482, %v505
    %v514 = vmul.f32 %v484, %v505
    %v515 = vmul.f32 %v486, %v505
    %v516 = vmul.f32 %v488, %v505
    %v517 = vmul.f32 %v490, %v505
    %v518 = vmul.f32 %v492, %v505
    %v519 = vmul.f32 %v494, %v505
    %v520 = vmul.f32 %v496, %v505
    %v521 = vmul.f32 %v498, %v505
    %v522 = vsub.f32 %v451, %v506
    %v523 = vsub.f32 %v452, %v507
    %v524 = vsub.f32 %v453, %v508
    %v525 = vsub.f32 %v454, %v509
    %v526 = vsub.f32 %v455, %v510
    %v527 = vsub.f32 %v456, %v511
    %v528 = vsub.f32 %v457, %v512
    %v529 = vsub.f32 %v458, %v513
    %v530 = vsub.f32 %v459, %v514
    %v531 = vsub.f32 %v460, %v515
    %v532 = vsub.f32 %v461, %v516
    %v533 = vsub.f32 %v462, %v517
    %v534 = vsub.f32 %v463, %v518
    %v535 = vsub.f32 %v464, %v519
    %v536 = vsub.f32 %v465, %v520
    %v537 = vsub.f32 %v466, %v521
    %v538 = vmul.f32 %v522, %v522
    %v539 = vmul.f32 %v523, %v523
    %v540 = vmul.f32 %v524, %v524
    %v541 = vmul.f32 %v525, %v525
    %v542 = vmul.f32 %v526, %v526
    %v543 = vmul.f32 %v527, %v527
    %v544 = vmul.f32 %v528, %v528
    %v545 = vmul.f32 %v529, %v529
    %v546 = vmul.f32 %v530, %v530
    %v547 = vmul.f32 %v531, %v531
    %v548 = vmul.f32 %v532, %v532
    %v549 = vmul.f32 %v533, %v533
    %v550 = vmul.f32 %v534, %v534
    %v551 = vmul.f32 %v535, %v535
    %v552 = vmul.f32 %v536, %v536
    %v553 = vmul.f32 %v537, %v537
    %554 = vadd.xlane.f32.xlu0 %v538
    %v555 = vpop.xlane.xlu0 %554
    %556 = vadd.xlane.f32.xlu0 %v539
    %v557 = vpop.xlane.xlu0 %556
    %558 = vadd.xlane.f32.xlu0 %v540
    %v559 = vpop.xlane.xlu0 %558
    %560 = vadd.xlane.f32.xlu0 %v541
    %v561 = vpop.xlane.xlu0 %560
    %562 = vadd.xlane.f32.xlu0 %v542
    %v563 = vpop.xlane.xlu0 %562
    %564 = vadd.xlane.f32.xlu0 %v543
    %v565 = vpop.xlane.xlu0 %564
    %566 = vadd.xlane.f32.xlu0 %v544
    %v567 = vpop.xlane.xlu0 %566
    %568 = vadd.xlane.f32.xlu0 %v545
    %v569 = vpop.xlane.xlu0 %568
    %570 = vadd.xlane.f32.xlu0 %v546
    %v571 = vpop.xlane.xlu0 %570
    %572 = vadd.xlane.f32.xlu0 %v547
    %v573 = vpop.xlane.xlu0 %572
    %574 = vadd.xlane.f32.xlu0 %v548
    %v575 = vpop.xlane.xlu0 %574
    %576 = vadd.xlane.f32.xlu0 %v549
    %v577 = vpop.xlane.xlu0 %576
    %578 = vadd.xlane.f32.xlu0 %v550
    %v579 = vpop.xlane.xlu0 %578
    %580 = vadd.xlane.f32.xlu0 %v551
    %v581 = vpop.xlane.xlu0 %580
    %582 = vadd.xlane.f32.xlu0 %v552
    %v583 = vpop.xlane.xlu0 %582
    %584 = vadd.xlane.f32.xlu0 %v553
    %v585 = vpop.xlane.xlu0 %584
    %v586 = vmul.f32 %v555, %v505
    %v587 = vmul.f32 %v557, %v505
    %v588 = vmul.f32 %v559, %v505
    %v589 = vmul.f32 %v561, %v505
    %v590 = vmul.f32 %v563, %v505
    %v591 = vmul.f32 %v565, %v505
    %v592 = vmul.f32 %v567, %v505
    %v593 = vmul.f32 %v569, %v505
    %v594 = vmul.f32 %v571, %v505
    %v595 = vmul.f32 %v573, %v505
    %v596 = vmul.f32 %v575, %v505
    %v597 = vmul.f32 %v577, %v505
    %v598 = vmul.f32 %v579, %v505
    %v599 = vmul.f32 %v581, %v505
    %v600 = vmul.f32 %v583, %v505
    %v601 = vmul.f32 %v585, %v505
    %v602 = vadd.f32 %v586, 1e-05
    %v603 = vadd.f32 %v587, 1e-05
    %v604 = vadd.f32 %v588, 1e-05
    %v605 = vadd.f32 %v589, 1e-05
    %v606 = vadd.f32 %v590, 1e-05
    %v607 = vadd.f32 %v591, 1e-05
    %v608 = vadd.f32 %v592, 1e-05
    %v609 = vadd.f32 %v593, 1e-05
    %v610 = vadd.f32 %v594, 1e-05
    %v611 = vadd.f32 %v595, 1e-05
    %v612 = vadd.f32 %v596, 1e-05
    %v613 = vadd.f32 %v597, 1e-05
    %v614 = vadd.f32 %v598, 1e-05
    %v615 = vadd.f32 %v599, 1e-05
    %v616 = vadd.f32 %v600, 1e-05
    %v617 = vadd.f32 %v601, 1e-05
    %v618 = vrsqrt.pop %v602
    %v619 = vmul.f32 %v618, %v602
    %v620 = vmul.f32 %v619, %v618
    %v621 = vmul.f32 0.5, %v620
    %v622 = vsub.f32 1.5, %v621
    %v623 = vmul.f32 %v618, %v622
    %vm624 = vweird.f32 %v602
    %vm625 = vweird.f32 %v618
    %vm626 = vmor %vm624, %vm625
    %v627 = vsel %vm626, %v618, %v623
    %v628 = vrsqrt.pop %v603
    %v629 = vmul.f32 %v628, %v603
    %v630 = vmul.f32 %v629, %v628
    %v631 = vmul.f32 0.5, %v630
    %v632 = vsub.f32 1.5, %v631
    %v633 = vmul.f32 %v628, %v632
    %vm634 = vweird.f32 %v603
    %vm635 = vweird.f32 %v628
    %vm636 = vmor %vm634, %vm635
    %v637 = vsel %vm636, %v628, %v633
    %v638 = vrsqrt.pop %v604
    %v639 = vmul.f32 %v638, %v604
    %v640 = vmul.f32 %v639, %v638
    %v641 = vmul.f32 0.5, %v640
    %v642 = vsub.f32 1.5, %v641
    %v643 = vmul.f32 %v638, %v642
    %vm644 = vweird.f32 %v604
    %vm645 = vweird.f32 %v638
    %vm646 = vmor %vm644, %vm645
    %v647 = vsel %vm646, %v638, %v643
    %v648 = vrsqrt.pop %v605
    %v649 = vmul.f32 %v648, %v605
    %v650 = vmul.f32 %v649, %v648
    %v651 = vmul.f32 0.5, %v650
    %v652 = vsub.f32 1.5, %v651
    %v653 = vmul.f32 %v648, %v652
    %vm654 = vweird.f32 %v605
    %vm655 = vweird.f32 %v648
    %vm656 = vmor %vm654, %vm655
    %v657 = vsel %vm656, %v648, %v653
    %v658 = vrsqrt.pop %v606
    %v659 = vmul.f32 %v658, %v606
    %v660 = vmul.f32 %v659, %v658
    %v661 = vmul.f32 0.5, %v660
    %v662 = vsub.f32 1.5, %v661
    %v663 = vmul.f32 %v658, %v662
    %vm664 = vweird.f32 %v606
    %vm665 = vweird.f32 %v658
    %vm666 = vmor %vm664, %vm665
    %v667 = vsel %vm666, %v658, %v663
    %v668 = vrsqrt.pop %v607
    %v669 = vmul.f32 %v668, %v607
    %v670 = vmul.f32 %v669, %v668
    %v671 = vmul.f32 0.5, %v670
    %v672 = vsub.f32 1.5, %v671
    %v673 = vmul.f32 %v668, %v672
    %vm674 = vweird.f32 %v607
    %vm675 = vweird.f32 %v668
    %vm676 = vmor %vm674, %vm675
    %v677 = vsel %vm676, %v668, %v673
    %v678 = vrsqrt.pop %v608
    %v679 = vmul.f32 %v678, %v608
    %v680 = vmul.f32 %v679, %v678
    %v681 = vmul.f32 0.5, %v680
    %v682 = vsub.f32 1.5, %v681
    %v683 = vmul.f32 %v678, %v682
    %vm684 = vweird.f32 %v608
    %vm685 = vweird.f32 %v678
    %vm686 = vmor %vm684, %vm685
    %v687 = vsel %vm686, %v678, %v683
    %v688 = vrsqrt.pop %v609
    %v689 = vmul.f32 %v688, %v609
    %v690 = vmul.f32 %v689, %v688
    %v691 = vmul.f32 0.5, %v690
    %v692 = vsub.f32 1.5, %v691
    %v693 = vmul.f32 %v688, %v692
    %vm694 = vweird.f32 %v609
    %vm695 = vweird.f32 %v688
    %vm696 = vmor %vm694, %vm695
    %v697 = vsel %vm696, %v688, %v693
    %v698 = vrsqrt.pop %v610
    %v699 = vmul.f32 %v698, %v610
    %v700 = vmul.f32 %v699, %v698
    %v701 = vmul.f32 0.5, %v700
    %v702 = vsub.f32 1.5, %v701
    %v703 = vmul.f32 %v698, %v702
    %vm704 = vweird.f32 %v610
    %vm705 = vweird.f32 %v698
    %vm706 = vmor %vm704, %vm705
    %v707 = vsel %vm706, %v698, %v703
    %v708 = vrsqrt.pop %v611
    %v709 = vmul.f32 %v708, %v611
    %v710 = vmul.f32 %v709, %v708
    %v711 = vmul.f32 0.5, %v710
    %v712 = vsub.f32 1.5, %v711
    %v713 = vmul.f32 %v708, %v712
    %vm714 = vweird.f32 %v611
    %vm715 = vweird.f32 %v708
    %vm716 = vmor %vm714, %vm715
    %v717 = vsel %vm716, %v708, %v713
    %v718 = vrsqrt.pop %v612
    %v719 = vmul.f32 %v718, %v612
    %v720 = vmul.f32 %v719, %v718
    %v721 = vmul.f32 0.5, %v720
    %v722 = vsub.f32 1.5, %v721
    %v723 = vmul.f32 %v718, %v722
    %vm724 = vweird.f32 %v612
    %vm725 = vweird.f32 %v718
    %vm726 = vmor %vm724, %vm725
    %v727 = vsel %vm726, %v718, %v723
    %v728 = vrsqrt.pop %v613
    %v729 = vmul.f32 %v728, %v613
    %v730 = vmul.f32 %v729, %v728
    %v731 = vmul.f32 0.5, %v730
    %v732 = vsub.f32 1.5, %v731
    %v733 = vmul.f32 %v728, %v732
    %vm734 = vweird.f32 %v613
    %vm735 = vweird.f32 %v728
    %vm736 = vmor %vm734, %vm735
    %v737 = vsel %vm736, %v728, %v733
    %v738 = vrsqrt.pop %v614
    %v739 = vmul.f32 %v738, %v614
    %v740 = vmul.f32 %v739, %v738
    %v741 = vmul.f32 0.5, %v740
    %v742 = vsub.f32 1.5, %v741
    %v743 = vmul.f32 %v738, %v742
    %vm744 = vweird.f32 %v614
    %vm745 = vweird.f32 %v738
    %vm746 = vmor %vm744, %vm745
    %v747 = vsel %vm746, %v738, %v743
    %v748 = vrsqrt.pop %v615
    %v749 = vmul.f32 %v748, %v615
    %v750 = vmul.f32 %v749, %v748
    %v751 = vmul.f32 0.5, %v750
    %v752 = vsub.f32 1.5, %v751
    %v753 = vmul.f32 %v748, %v752
    %vm754 = vweird.f32 %v615
    %vm755 = vweird.f32 %v748
    %vm756 = vmor %vm754, %vm755
    %v757 = vsel %vm756, %v748, %v753
    %v758 = vrsqrt.pop %v616
    %v759 = vmul.f32 %v758, %v616
    %v760 = vmul.f32 %v759, %v758
    %v761 = vmul.f32 0.5, %v760
    %v762 = vsub.f32 1.5, %v761
    %v763 = vmul.f32 %v758, %v762
    %vm764 = vweird.f32 %v616
    %vm765 = vweird.f32 %v758
    %vm766 = vmor %vm764, %vm765
    %v767 = vsel %vm766, %v758, %v763
    %v768 = vrsqrt.pop %v617
    %v769 = vmul.f32 %v768, %v617
    %v770 = vmul.f32 %v769, %v768
    %v771 = vmul.f32 0.5, %v770
    %v772 = vsub.f32 1.5, %v771
    %v773 = vmul.f32 %v768, %v772
    %vm774 = vweird.f32 %v617
    %vm775 = vweird.f32 %v768
    %vm776 = vmor %vm774, %vm775
    %v777 = vsel %vm776, %v768, %v773
    %v778 = vmul.f32 %v522, %v627
    %v779 = vmul.f32 %v523, %v637
    %v780 = vmul.f32 %v524, %v647
    %v781 = vmul.f32 %v525, %v657
    %v782 = vmul.f32 %v526, %v667
    %v783 = vmul.f32 %v527, %v677
    %v784 = vmul.f32 %v528, %v687
    %v785 = vmul.f32 %v529, %v697
    %v786 = vmul.f32 %v530, %v707
    %v787 = vmul.f32 %v531, %v717
    %v788 = vmul.f32 %v532, %v727
    %v789 = vmul.f32 %v533, %v737
    %v790 = vmul.f32 %v534, %v747
    %v791 = vmul.f32 %v535, %v757
    %v792 = vmul.f32 %v536, %v767
    %v793 = vmul.f32 %v537, %v777
    %v794 = vld [vmem:[%s4] sm:$0x1]
    %v796 = vperm.slane %v794, 0
    %v798 = vmul.f32 %v778, %v796
    %v799 = vmul.f32 %v779, %v796
    %v800 = vmul.f32 %v780, %v796
    %v801 = vmul.f32 %v781, %v796
    %v802 = vmul.f32 %v782, %v796
    %v803 = vmul.f32 %v783, %v796
    %v804 = vmul.f32 %v784, %v796
    %v805 = vmul.f32 %v785, %v796
    %v806 = vmul.f32 %v786, %v796
    %v807 = vmul.f32 %v787, %v796
    %v808 = vmul.f32 %v788, %v796
    %v809 = vmul.f32 %v789, %v796
    %v810 = vmul.f32 %v790, %v796
    %v811 = vmul.f32 %v791, %v796
    %v812 = vmul.f32 %v792, %v796
    %v813 = vmul.f32 %v793, %v796
    %v814 = vld [vmem:[%s5] sm:$0x1]
    %v816 = vperm.slane %v814, 0
    %v818 = vadd.f32 %v798, %v816
    %v819 = vadd.f32 %v799, %v816
    %v820 = vadd.f32 %v800, %v816
    %v821 = vadd.f32 %v801, %v816
    %v822 = vadd.f32 %v802, %v816
    %v823 = vadd.f32 %v803, %v816
    %v824 = vadd.f32 %v804, %v816
    %v825 = vadd.f32 %v805, %v816
    %v826 = vadd.f32 %v806, %v816
    %v827 = vadd.f32 %v807, %v816
    %v828 = vadd.f32 %v808, %v816
    %v829 = vadd.f32 %v809, %v816
    %v830 = vadd.f32 %v810, %v816
    %v831 = vadd.f32 %v811, %v816
    %v832 = vadd.f32 %v812, %v816
    %v833 = vadd.f32 %v813, %v816
    %834 = vst [vmem:[#allocation6] sm:$0xff] %v818
    %835 = vst [vmem:[#allocation6 + $0x8] sm:$0xff] %v819
    %836 = vst [vmem:[#allocation6 + $0x10] sm:$0xff] %v820
    %837 = vst [vmem:[#allocation6 + $0x18] sm:$0xff] %v821
    %838 = vst [vmem:[#allocation6 + $0x20] sm:$0xff] %v822
    %839 = vst [vmem:[#allocation6 + $0x28] sm:$0xff] %v823
    %840 = vst [vmem:[#allocation6 + $0x30] sm:$0xff] %v824
    %841 = vst [vmem:[#allocation6 + $0x38] sm:$0xff] %v825
    %842 = vst [vmem:[#allocation6 + $0x40] sm:$0xff] %v826
    %843 = vst [vmem:[#allocation6 + $0x48] sm:$0xff] %v827
    %844 = vst [vmem:[#allocation6 + $0x50] sm:$0xff] %v828
    %845 = vst [vmem:[#allocation6 + $0x58] sm:$0xff] %v829
    %846 = vst [vmem:[#allocation6 + $0x60] sm:$0xff] %v830
    %847 = vst [vmem:[#allocation6 + $0x68] sm:$0xff] %v831
    %848 = vst [vmem:[#allocation6 + $0x70] sm:$0xff] %v832
    %849 = vst [vmem:[#allocation6 + $0x78] sm:$0xff] %v833
    // Predicated region
    $region55: #{tpu_custom_call.1} parent=1 // pred_check
      _
    $region56: #{tpu_custom_call.1} parent=1 // pred_check_branch
      %851 = sbr.rel (0) target = $region58
    $region57: #{tpu_custom_call.1} parent=1 // pred_region
      %853 = vsyncadd [#allocation7], 0
      %s854 = sshll.u32 [#allocation6], 4
      %s855 = int_to_ptr.vmem [resolvable:$true] %s854
      %s856 = sshll.u32 %s6, 4
      %s857 = int_to_ptr.hbm [resolvable:$true] %s856
      %862 = dma.vmem_to_hbm [thread:$0]  %s855, 2048, %s857, [#allocation7], 128, 128, 8
    $region58: #{tpu_custom_call.1} parent=1 // pred_fallthru
      _
    // Predicated region
    $region59: #{tpu_custom_call.1} parent=1 // pred_check
      _
    $region60: #{tpu_custom_call.1} parent=1 // pred_check_branch
      %864 = sbr.rel (0) target = $region62
    $region61: #{tpu_custom_call.1} parent=1 // pred_region
      %866 = dma.done [#allocation7], 2048
    $region62: #{tpu_custom_call.1} parent=1 // pred_fallthru
      _
    %867 = vsyncpa [#allocation7], 1
  %868 = vsyncmov [#allocation3]
  %s869 = vpop.sfrf %868
  %p870 = scmp.eq.s32.totalorder %s869, 0
  %p871 = pneg %p870
  %873 = shalt.err (%p871)
  %s874 = scalar_lea.sflag [#allocation3], 1
  %875 = vsyncmov %s874
  %s876 = vpop.sfrf %875
  %p877 = scmp.eq.s32.totalorder %s876, 0
  %p878 = pneg %p877
  %880 = shalt.err (%p878)

</llo_original>
